<compile_context>
chip_gen: v5e
topology: v5e:2x2
jax: 0.10.0
libtpu: 0.0.40
codegen_flags: <defaults>
</compile_context>

<pallas_src>
import jax
import jax.numpy as jnp
from jax.experimental import pallas as pl
from jax.experimental.pallas import tpu as pltpu


def _round_up(x, m):
    return ((x + m - 1) // m) * m


def _sublane(dtype):
    # sublane packing: f32 -> 8, bf16 -> 16, int8/fp8 -> 32
    return max(8, 32 // jnp.dtype(dtype).itemsize)


def _vmem_budget_bytes():
    try:
        cap = pltpu.get_tpu_info().vmem_capacity_bytes
    except Exception:
        cap = 64 * 1024 * 1024          # v7x-conservative fallback
    return int(0.8 * cap)


# ---------------------------------------------------------------------------
# Kernels
# ---------------------------------------------------------------------------
def _ffn_resident_kernel(x_ref, w1_ref, b1_ref, w2_ref, b2_ref, o_ref):
    # Weights fully VMEM-resident (constant index maps). grid = (row_tiles,)
    # x_ref : (tile_n, d_model)   w1_ref: (d_model, d_ff)   b1_ref: (1, d_ff) f32
    # w2_ref: (d_ff, d_model)     b2_ref: (1, d_model) f32  o_ref : (tile_n, d_model)
    x = x_ref[...]                                         # bf16 on the MXU
    h = jnp.dot(x, w1_ref[...], preferred_element_type=jnp.float32)
    h = jnp.maximum(h + b1_ref[...], 0.0)                  # bias + ReLU in f32
    # dropout (inference mode) == identity
    # TODO(synk): training-mode dropout (stochastic masking via pltpu.prng_*)
    y = jnp.dot(h.astype(x.dtype), w2_ref[...],
                preferred_element_type=jnp.float32)
    o_ref[...] = (y + b2_ref[...]).astype(o_ref.dtype)


def _ffn_streamed_kernel(x_ref, w1_ref, b1_ref, w2_ref, b2_ref, o_ref, acc_ref):
    # d_ff streamed in tile_k chunks. grid = (row_tiles, d_ff // tile_k)
    # w1_ref: (d_model, tile_k)   b1_ref: (1, tile_k) f32
    # w2_ref: (tile_k, d_model)   acc_ref: (tile_n, d_model) f32
    k = pl.program_id(1)

    @pl.when(k == 0)
    def _():
        # Seed the f32 accumulator with the output bias -> no epilogue add.
        acc_ref[...] = jnp.broadcast_to(b2_ref[...], acc_ref.shape)

    x = x_ref[...]
    h = jnp.dot(x, w1_ref[...], preferred_element_type=jnp.float32)
    h = jnp.maximum(h + b1_ref[...], 0.0)
    # dropout (inference mode) == identity
    acc_ref[...] += jnp.dot(h.astype(x.dtype), w2_ref[...],
                            preferred_element_type=jnp.float32)

    @pl.when(k == pl.num_programs(1) - 1)
    def _():
        o_ref[...] = acc_ref[...].astype(o_ref.dtype)


# ---------------------------------------------------------------------------
# Parameter prep (one-time, at parameter init — NOT per forward call)
# ---------------------------------------------------------------------------
def prepare_ffn_params(w1, b1, w2, b2, *, compute_dtype=jnp.bfloat16):
    """PyTorch nn.Linear stores weight as (out, in); the kernel wants (in, out)
    weights in the MXU compute dtype (bf16 by default) and (1, out) f32 biases
    (biases are added to f32 accumulators, so keep them full precision)."""
    d_ff, d_model = w1.shape
    return (jnp.transpose(w1).astype(compute_dtype),       # (d_model, d_ff)
            b1.reshape(1, d_ff).astype(jnp.float32),
            jnp.transpose(w2).astype(compute_dtype),       # (d_ff, d_model)
            b2.reshape(1, d_model).astype(jnp.float32))


# ---------------------------------------------------------------------------
# Tiling heuristics
# ---------------------------------------------------------------------------
def _pick_tile_k(d_ff, want=512):
    # Largest multiple of 128 <= `want` that divides d_ff; full d_ff otherwise.
    if d_ff % 128 != 0 or d_ff <= want:
        return d_ff
    for cand in range(want, 0, -128):
        if d_ff % cand == 0:
            return cand
    return d_ff


def _est_vmem_bytes(tile_n, tile_k, d_model, resident, cdt_size, out_size):
    # Double-buffered pipelined blocks + the compiler-internal scratch for the
    # (tile_n, tile_k) f32 intermediate h and its compute-dtype copy.
    b = 2 * tile_n * d_model * cdt_size                            # x blocks
    b += 2 * tile_n * d_model * out_size                           # y blocks
    b += 2 * (d_model * tile_k + tile_k * d_model) * cdt_size      # w1 + w2
    b += 2 * (tile_k + d_model) * 4                                # biases (f32)
    b += tile_n * tile_k * (4 + cdt_size)                          # h + h.astype
    if not resident:
        b += tile_n * d_model * 4                                  # f32 accumulator
    return b


def _resolve_tiling(n, d_model, d_ff, cdt_size, out_size, sub, vmem_budget,
                    tile_n, tile_k):
    user_tile_n = tile_n
    # Weight residency: double-buffered W1 + W2 must fit in half the budget.
    w_vmem = 2 * 2 * d_model * d_ff * cdt_size
    try_resident = (tile_k is None or tile_k >= d_ff) and w_vmem <= vmem_budget // 2
    tn, tk = sub, d_ff
    for resident in ([True, False] if try_resident else [False]):
        tk = d_ff if resident else (tile_k if (tile_k is not None and tile_k < d_ff)
                                    else _pick_tile_k(d_ff))
        if user_tile_n is None:
            # >=2 row tiles so the 'parallel' axis shards across v7x's 2 TCs;
            # bigger tiles when streaming (v6e roofline ridge ~650 flops/byte).
            cap = 512 if resident else 1024
            tn = min(cap, _round_up(max(-(-n // 2), sub), sub))
        else:
            tn = max(sub, _round_up(user_tile_n, sub))
        while (tn > sub and
               _est_vmem_bytes(tn, tk, d_model, resident, cdt_size,
                               out_size) > vmem_budget):
            tn = max(sub, _round_up(tn // 2, sub))
        if _est_vmem_bytes(tn, tk, d_model, resident, cdt_size,
                           out_size) <= vmem_budget:
            return resident, tn, tk
    return False, tn, tk    # best effort


# ---------------------------------------------------------------------------
# Forward
# ---------------------------------------------------------------------------
def positionwise_feed_forward(x, params, *, tile_n=None, tile_k=None):
    """Eval-mode FFN: w_2(relu(w_1(x))). x: (..., d_model); params from
    prepare_ffn_params()."""
    w1_t, b1_r, w2_t, b2_r = params
    d_model, d_ff = w1_t.shape
    compute_dtype = w1_t.dtype
    cdt_size = jnp.dtype(compute_dtype).itemsize
    out_dtype = x.dtype
    out_size = jnp.dtype(out_dtype).itemsize

    orig_shape = x.shape
    x2 = x.reshape(-1, d_model).astype(compute_dtype)   # feed the MXU bf16
    n = x2.shape[0]
    sub = _sublane(compute_dtype)

    vmem_budget = _vmem_budget_bytes()
    resident, tile_n, tile_k = _resolve_tiling(
        n, d_model, d_ff, cdt_size, out_size, sub, vmem_budget, tile_n, tile_k)
    assert d_ff % tile_k == 0, "tile_k must divide d_ff"
    assert tile_k == d_ff or tile_k % 128 == 0, "tile_k must be lane-aligned"

    # Pad rows to a whole number of tiles; sliced back off at the end.
    # TODO(synk): mask the last row tile instead of a full jnp.pad copy of x.
    n_pad = _round_up(n, tile_n)
    if n_pad != n:
        x2 = jnp.pad(x2, ((0, n_pad - n), (0, 0)))
    num_row_tiles = n_pad // tile_n

    est_bytes = _est_vmem_bytes(tile_n, tile_k, d_model, resident, cdt_size,
                                out_size)
    vmem_limit = int(min(vmem_budget, max(2 * est_bytes, 32 * 1024 * 1024)))

    # Honest cost estimate (weights read once when resident, once per row tile
    # when streamed).
    weight_reads = 1 if resident else num_row_tiles
    flops = 4 * n_pad * d_model * d_ff
    bytes_accessed = (n_pad * d_model * cdt_size
                      + weight_reads * (w1_t.size + w2_t.size) * cdt_size
                      + (b1_r.size + b2_r.size) * 4
                      + n_pad * d_model * out_size)

    if resident:
        kernel = _ffn_resident_kernel
        grid = (num_row_tiles,)
        in_specs = [
            pl.BlockSpec((tile_n, d_model), lambda i: (i, 0)),
            pl.BlockSpec((d_model, d_ff), lambda i: (0, 0)),   # resident
            pl.BlockSpec((1, d_ff), lambda i: (0, 0)),
            pl.BlockSpec((d_ff, d_model), lambda i: (0, 0)),   # resident
            pl.BlockSpec((1, d_model), lambda i: (0, 0)),
        ]
        out_specs = pl.BlockSpec((tile_n, d_model), lambda i: (i, 0))
        scratch_shapes = []
        dims = ("parallel",)
    else:
        kernel = _ffn_streamed_kernel
        grid = (num_row_tiles, d_ff // tile_k)
        in_specs = [
            pl.BlockSpec((tile_n, d_model), lambda i, k: (i, 0)),
            pl.BlockSpec((d_model, tile_k), lambda i, k: (0, k)),
            pl.BlockSpec((1, tile_k), lambda i, k: (0, k)),
            pl.BlockSpec((tile_k, d_model), lambda i, k: (k, 0)),
            pl.BlockSpec((1, d_model), lambda i, k: (0, 0)),
        ]
        out_specs = pl.BlockSpec((tile_n, d_model), lambda i, k: (i, 0))
        scratch_shapes = [pltpu.VMEM((tile_n, d_model), jnp.float32)]
        dims = ("parallel", "arbitrary")

    out = pl.pallas_call(
        kernel,
        out_shape=jax.ShapeDtypeStruct((n_pad, d_model), out_dtype),
        grid_spec=pltpu.PrefetchScalarGridSpec(
            num_scalar_prefetch=0,
            grid=grid,
            in_specs=in_specs,
            out_specs=out_specs,
            scratch_shapes=scratch_shapes,
        ),
        compiler_params=pltpu.CompilerParams(
            dimension_semantics=dims,
            vmem_limit_bytes=vmem_limit,
        ),
        cost_estimate=pl.CostEstimate(
            flops=flops, transcendentals=0, bytes_accessed=bytes_accessed),
    )(x2, w1_t, b1_r, w2_t, b2_r)

    if n_pad != n:
        out = out[:n]
    return out.reshape(orig_shape)


# ---------------------------------------------------------------------------
# Pure-JAX reference (mirrors the kernel's compute dtype)
# ---------------------------------------------------------------------------
def _reference_ffn(x, w1, b1, w2, b2, compute_dtype=jnp.float32):
    cd = compute_dtype
    h = jnp.dot(x.astype(cd), w1.T.astype(cd),
                preferred_element_type=jnp.float32) + b1
    h = jnp.maximum(h, 0.0)
    y = jnp.dot(h.astype(cd), w2.T.astype(cd),
                preferred_element_type=jnp.float32) + b2
    return y.astype(x.dtype)


if __name__ == "__main__":
    key = jax.random.PRNGKey(0)
    # Small but lane-dense shapes (d_model, d_ff multiples of 128) so stores
    # are unmasked; two row tiles so the parallel axis can shard on v7x.
    batch, seq, d_model, d_ff = 2, 64, 128, 256

    k_x, k_w1, k_b1, k_w2, k_b2 = jax.random.split(key, 5)
    x = jax.random.normal(k_x, (batch, seq, d_model), dtype=jnp.float32)
    # PyTorch nn.Linear layout: weight (out, in), bias (out,)
    w1 = jax.random.normal(k_w1, (d_ff, d_model), dtype=jnp.float32) * 0.1
    b1 = jax.random.normal(k_b1, (d_ff,), dtype=jnp.float32) * 0.1
    w2 = jax.random.normal(k_w2, (d_model, d_ff), dtype=jnp.float32) * 0.1
    b2 = jax.random.normal(k_b2, (d_model,), dtype=jnp.float32) * 0.1

    params = prepare_ffn_params(w1, b1, w2, b2)   # one-time: (in,out) bf16 + f32 biases

    # Path A: weights VMEM-resident (auto-selected for these shapes).
    y = jax.block_until_ready(positionwise_feed_forward(x, params))
    # Path B: force the streamed d_ff-reduction path to exercise it too.
    y_stream = jax.block_until_ready(
        positionwise_feed_forward(x, params, tile_n=64, tile_k=128))

    y_ref = _reference_ffn(x, w1, b1, w2, b2, compute_dtype=jnp.bfloat16)
    assert y.shape == (batch, seq, d_model)
    assert jnp.allclose(y, y_ref, atol=1e-2, rtol=1e-2), "resident path mismatch"
    assert jnp.allclose(y_stream, y_ref, atol=1e-2, rtol=1e-2), "streamed path mismatch"

    print("KERNEL_OK")
</pallas_src>

<mosaic_0001>
module attributes {stable_mosaic.version = 11 : i64} {
  func.func @_ffn_resident_kernel(%arg0: i32, %arg1: memref<64x128xbf16, #tpu.memory_space<vmem>>, %arg2: memref<128x256xbf16, #tpu.memory_space<vmem>>, %arg3: memref<1x256xf32, #tpu.memory_space<vmem>>, %arg4: memref<256x128xbf16, #tpu.memory_space<vmem>>, %arg5: memref<1x128xf32, #tpu.memory_space<vmem>>, %arg6: memref<64x128xf32, #tpu.memory_space<vmem>>) attributes {dimension_semantics = [#tpu.dimension_semantics<parallel>], iteration_bounds = array<i64: 2>, scalar_prefetch = 0 : i64, scratch_operands = 0 : i64, tpu.core_type = #tpu.core_type<tc>, window_params = [{transform_indices = @transform_0, window_bounds = array<i64: 64, 128>}, {pipeline_mode = #tpu.pipeline_mode<synchronous>, transform_indices = @transform_1, window_bounds = array<i64: 128, 256>}, {pipeline_mode = #tpu.pipeline_mode<synchronous>, transform_indices = @transform_2, window_bounds = array<i64: 1, 256>}, {pipeline_mode = #tpu.pipeline_mode<synchronous>, transform_indices = @transform_3, window_bounds = array<i64: 256, 128>}, {pipeline_mode = #tpu.pipeline_mode<synchronous>, transform_indices = @transform_4, window_bounds = array<i64: 1, 128>}, {transform_indices = @transform_5, window_bounds = array<i64: 64, 128>}]} {
    %c0 = arith.constant 0 : index
    %c0_0 = arith.constant 0 : index
    %0 = vector.load %arg1[%c0, %c0_0] : memref<64x128xbf16, #tpu.memory_space<vmem>>, vector<64x128xbf16>
    %c0_1 = arith.constant 0 : index
    %c0_2 = arith.constant 0 : index
    %1 = vector.load %arg2[%c0_1, %c0_2] : memref<128x256xbf16, #tpu.memory_space<vmem>>, vector<128x256xbf16>
    %cst = arith.constant dense<0.000000e+00> : vector<64x256xf32>
    %2 = tpu.matmul %0, %1, %cst {dimension_numbers = #tpu.dot_dimension_numbers<[1], [0], [0], [1], [0, 0, 1, 1], [], []>} : vector<64x128xbf16>, vector<128x256xbf16>, vector<64x256xf32> -> vector<64x256xf32>
    %c0_3 = arith.constant 0 : index
    %c0_4 = arith.constant 0 : index
    %3 = vector.load %arg3[%c0_3, %c0_4] : memref<1x256xf32, #tpu.memory_space<vmem>>, vector<1x256xf32>
    %4 = vector.broadcast %3 : vector<1x256xf32> to vector<64x256xf32>
    %5 = arith.addf %2, %4 : vector<64x256xf32>
    %cst_5 = arith.constant 0.000000e+00 : f32
    %6 = vector.broadcast %cst_5 : f32 to vector<64x256xf32>
    %7 = arith.maximumf %5, %6 : vector<64x256xf32>
    %8 = arith.truncf %7 : vector<64x256xf32> to vector<64x256xbf16>
    %c0_6 = arith.constant 0 : index
    %c0_7 = arith.constant 0 : index
    %9 = vector.load %arg4[%c0_6, %c0_7] : memref<256x128xbf16, #tpu.memory_space<vmem>>, vector<256x128xbf16>
    %cst_8 = arith.constant dense<0.000000e+00> : vector<64x128xf32>
    %10 = tpu.matmul %8, %9, %cst_8 {dimension_numbers = #tpu.dot_dimension_numbers<[1], [0], [0], [1], [0, 0, 1, 1], [], []>} : vector<64x256xbf16>, vector<256x128xbf16>, vector<64x128xf32> -> vector<64x128xf32>
    %c0_9 = arith.constant 0 : index
    %c0_10 = arith.constant 0 : index
    %11 = vector.load %arg5[%c0_9, %c0_10] : memref<1x128xf32, #tpu.memory_space<vmem>>, vector<1x128xf32>
    %12 = vector.broadcast %11 : vector<1x128xf32> to vector<64x128xf32>
    %13 = arith.addf %10, %12 : vector<64x128xf32>
    %c0_11 = arith.constant 0 : index
    %c0_12 = arith.constant 0 : index
    %14 = vector.load %arg6[%c0_11, %c0_12] : memref<64x128xf32, #tpu.memory_space<vmem>>, vector<64x128xf32>
    tpu.vector_store %arg6[%c0_11, %c0_12], %13 {strides = array<i32>} : memref<64x128xf32, #tpu.memory_space<vmem>>, vector<64x128xf32>,
    return
  }
  func.func @transform_0(%arg0: i32) -> (i32, i32) {
    %c0_i32 = arith.constant 0 : i32
    %c0_i32_0 = arith.constant 0 : i32
    return %arg0, %c0_i32 : i32, i32
  }
  func.func @transform_1(%arg0: i32) -> (i32, i32) {
    %c0_i32 = arith.constant 0 : i32
    %c0_i32_0 = arith.constant 0 : i32
    %c0_i32_1 = arith.constant 0 : i32
    return %c0_i32, %c0_i32_0 : i32, i32
  }
  func.func @transform_2(%arg0: i32) -> (i32, i32) {
    %c0_i32 = arith.constant 0 : i32
    %c0_i32_0 = arith.constant 0 : i32
    %c0_i32_1 = arith.constant 0 : i32
    return %c0_i32, %c0_i32_0 : i32, i32
  }
  func.func @transform_3(%arg0: i32) -> (i32, i32) {
    %c0_i32 = arith.constant 0 : i32
    %c0_i32_0 = arith.constant 0 : i32
    %c0_i32_1 = arith.constant 0 : i32
    return %c0_i32, %c0_i32_0 : i32, i32
  }
  func.func @transform_4(%arg0: i32) -> (i32, i32) {
    %c0_i32 = arith.constant 0 : i32
    %c0_i32_0 = arith.constant 0 : i32
    %c0_i32_1 = arith.constant 0 : i32
    return %c0_i32, %c0_i32_0 : i32, i32
  }
  func.func @transform_5(%arg0: i32) -> (i32, i32) {
    %c0_i32 = arith.constant 0 : i32
    %c0_i32_0 = arith.constant 0 : i32
    return %arg0, %c0_i32 : i32, i32
  }
}

</mosaic_0001>

<llo_original>
// kernel: tpu_custom_call.1
$region0: #{tpu_custom_call.1}
  #allocation0 [shape = 'u32[]', space=smem, size = 0x4, offset = 0x4, fixed_abs, tag = 'smem constant byte address 0x4 - core index']
  #allocation1 [shape = 'u32[72,128]{1,0:T(1,128)}', space=vmem, size = 0x9000, scoped, tag = 'internal scratch']
  %s0 = inlined_call_operand.hbm [shape: bf16[128,128], index: 0, kind: input, shape index: {}]
  %s1 = inlined_call_operand.hbm [shape: bf16[128,256], index: 1, kind: input, shape index: {}]
  %s2 = inlined_call_operand.hbm [shape: f32[1,256], index: 2, kind: input, shape index: {}]
  %s3 = inlined_call_operand.hbm [shape: bf16[256,128], index: 3, kind: input, shape index: {}]
  %s4 = inlined_call_operand.vmem [shape: f32[1,128], index: 4, kind: input, shape index: {}]
  %s5 = inlined_call_operand.hbm [shape: f32[128,128], index: 5, kind: output, shape index: {}]
  %s6 = sld [smem:[#allocation0]]
  $region69: #{tpu_custom_call.1} parent=0
    _
  %s8 = ssub.s32 1, %s6
  %s9 = scalar_select 0, %s8, %s6
  $region1: #{tpu_custom_call.1} parent=0
    #allocation2 [shape = 'u8[32768]{0}', space=vmem, size = 0x8000, scoped, tag = 'input window, operand 0']
    #allocation3 [shape = 's32[2]{0}', space=sflag, size = 0x8, scoped, tag = 'scoped memory for tpu_custom_call.1']
    #allocation4 [shape = 's32[2]{0}', space=sflag, size = 0x8, scoped, tag = 'scoped memory for tpu_custom_call.1']
    #allocation5 [shape = 'u8[65536]{0}', space=vmem, size = 0x10000, scoped, tag = 'input window, operand 1, single buffered']
    #allocation6 [shape = 's32[1]{0}', space=sflag, size = 0x4, scoped, tag = 'scoped memory for tpu_custom_call.1']
    #allocation7 [shape = 'u8[1024]{0}', space=vmem, size = 0x400, scoped, tag = 'input window, operand 2, single buffered']
    #allocation8 [shape = 'u8[65536]{0}', space=vmem, size = 0x10000, scoped, tag = 'input window, operand 3, single buffered']
    #allocation9 [shape = 's32[1]{0}', space=sflag, size = 0x4, scoped, tag = 'scoped memory for tpu_custom_call.1']
    #allocation10 [shape = 'u8[65536]{0}', space=vmem, size = 0x10000, scoped, tag = 'output window, operand 0']
    %10 = vsyncpa [#allocation3], 0
    %s11 = scalar_lea.sflag [#allocation3], 1
    %12 = vsyncpa %s11, 0
    %13 = vsyncpa [#allocation6], 0
    %14 = vsyncpa [#allocation9], 0
    %15 = vsyncpa [#allocation4], 0
    %s16 = scalar_lea.sflag [#allocation4], 1
    %17 = vsyncpa %s16, 0
    loop: start=0, step=1, limit=4
    $region2: #{tpu_custom_call.1} parent=1 // loop_pre_header
      _
    $region3: #{tpu_custom_call.1} parent=1 // loop_header
      %s19 = sphi 0, %s23
      %p20 = scmp.ge.s32.totalorder %s19, 4
      %s29 = sphi 0, %s31
      %s32 = sphi 0, %s29
      %s33 = sphi 0, %s32
      %s49 = sphi 0, %s33
      %s53 = sphi 0, %s53
      %s55 = sphi 0, %s53
      %s56 = sphi 0, %s55
      %s70 = sphi 0, %s56
      %s74 = sphi 0, %s74
      %s76 = sphi 0, %s74
      %s77 = sphi 0, %s76
      %s91 = sphi 0, %s77
      %s95 = sphi 0, %s95
      %s97 = sphi 0, %s95
      %s98 = sphi 0, %s97
      %s112 = sphi 0, %s98
      %s116 = sphi 0, %s116
      %s118 = sphi 0, %s116
      %s119 = sphi 0, %s118
      %s133 = sphi 0, %s119
      %s139 = sphi 0, %s141
      %s142 = sphi 0, %s139
      %s143 = sphi 0, %s142
      %s159 = sphi 0, %s143
    $region4: #{tpu_custom_call.1} parent=1 // loop_header_branch
      %22 = sbr.rel (%p20) target = $region8
    $region5: #{tpu_custom_call.1} parent=1 // loop_body
      %s24 = ssub.s32 %s19, 1
      %s25 = ssub.s32 %s19, 2
      %s26 = sadd.s32 %s19, 1
      %s27 = ssub.s32 %s19, %s26
      %p28 = scmp.eq.s32.totalorder %s27, 0
      %s30 = sadd.s32 %s29, 1
      %s31 = scalar_select %p28, %s29, %s30
      %p34 = pneg %p28
      %p35 = scmp.eq.s32.totalorder %s19, 1
      %p36 = por %p34, %p35
      %p37 = scmp.ne.s32.totalorder %s29, %s32
      %p38 = scmp.eq.s32.totalorder %s19, 0
      %p39 = por %p37, %p38
      %p40 = scmp.ne.s32.totalorder %s29, %s32
      %p41 = scmp.eq.s32.totalorder %s24, 1
      %p42 = por %p40, %p41
      %p43 = scmp.ne.s32.totalorder %s32, %s33
      %p44 = scmp.eq.s32.totalorder %s24, 0
      %p45 = por %p43, %p44
      %p46 = scmp.ne.s32.totalorder %s32, %s33
      %p47 = scmp.eq.s32.totalorder %s25, 1
      %p48 = por %p46, %p47
      %p50 = scmp.ne.s32.totalorder %s33, %s49
      %p51 = scmp.eq.s32.totalorder %s25, 0
      %p52 = por %p50, %p51
      %s54 = sadd.s32 %s53, 1
      %p57 = scmp.eq.s32.totalorder %s19, 1
      %p58 = scmp.ne.s32.totalorder %s53, %s55
      %p59 = scmp.eq.s32.totalorder %s19, 0
      %p60 = por %p58, %p59
      %p61 = scmp.ne.s32.totalorder %s53, %s55
      %p62 = scmp.eq.s32.totalorder %s24, 1
      %p63 = por %p61, %p62
      %p64 = scmp.ne.s32.totalorder %s55, %s56
      %p65 = scmp.eq.s32.totalorder %s24, 0
      %p66 = por %p64, %p65
      %p67 = scmp.ne.s32.totalorder %s55, %s56
      %p68 = scmp.eq.s32.totalorder %s25, 1
      %p69 = por %p67, %p68
      %p71 = scmp.ne.s32.totalorder %s56, %s70
      %p72 = scmp.eq.s32.totalorder %s25, 0
      %p73 = por %p71, %p72
      %s75 = sadd.s32 %s74, 1
      %p78 = scmp.eq.s32.totalorder %s19, 1
      %p79 = scmp.ne.s32.totalorder %s74, %s76
      %p80 = scmp.eq.s32.totalorder %s19, 0
      %p81 = por %p79, %p80
      %p82 = scmp.ne.s32.totalorder %s74, %s76
      %p83 = scmp.eq.s32.totalorder %s24, 1
      %p84 = por %p82, %p83
      %p85 = scmp.ne.s32.totalorder %s76, %s77
      %p86 = scmp.eq.s32.totalorder %s24, 0
      %p87 = por %p85, %p86
      %p88 = scmp.ne.s32.totalorder %s76, %s77
      %p89 = scmp.eq.s32.totalorder %s25, 1
      %p90 = por %p88, %p89
      %p92 = scmp.ne.s32.totalorder %s77, %s91
      %p93 = scmp.eq.s32.totalorder %s25, 0
      %p94 = por %p92, %p93
      %s96 = sadd.s32 %s95, 1
      %p99 = scmp.eq.s32.totalorder %s19, 1
      %p100 = scmp.ne.s32.totalorder %s95, %s97
      %p101 = scmp.eq.s32.totalorder %s19, 0
      %p102 = por %p100, %p101
      %p103 = scmp.ne.s32.totalorder %s95, %s97
      %p104 = scmp.eq.s32.totalorder %s24, 1
      %p105 = por %p103, %p104
      %p106 = scmp.ne.s32.totalorder %s97, %s98
      %p107 = scmp.eq.s32.totalorder %s24, 0
      %p108 = por %p106, %p107
      %p109 = scmp.ne.s32.totalorder %s97, %s98
      %p110 = scmp.eq.s32.totalorder %s25, 1
      %p111 = por %p109, %p110
      %p113 = scmp.ne.s32.totalorder %s98, %s112
      %p114 = scmp.eq.s32.totalorder %s25, 0
      %p115 = por %p113, %p114
      %s117 = sadd.s32 %s116, 1
      %p120 = scmp.eq.s32.totalorder %s19, 1
      %p121 = scmp.ne.s32.totalorder %s116, %s118
      %p122 = scmp.eq.s32.totalorder %s19, 0
      %p123 = por %p121, %p122
      %p124 = scmp.ne.s32.totalorder %s116, %s118
      %p125 = scmp.eq.s32.totalorder %s24, 1
      %p126 = por %p124, %p125
      %p127 = scmp.ne.s32.totalorder %s118, %s119
      %p128 = scmp.eq.s32.totalorder %s24, 0
      %p129 = por %p127, %p128
      %p130 = scmp.ne.s32.totalorder %s118, %s119
      %p131 = scmp.eq.s32.totalorder %s25, 1
      %p132 = por %p130, %p131
      %p134 = scmp.ne.s32.totalorder %s119, %s133
      %p135 = scmp.eq.s32.totalorder %s25, 0
      %p136 = por %p134, %p135
      %s137 = ssub.s32 %s19, %s26
      %p138 = scmp.eq.s32.totalorder %s137, 0
      %s140 = sadd.s32 %s139, 1
      %s141 = scalar_select %p138, %s139, %s140
      %p144 = pneg %p138
      %p145 = scmp.eq.s32.totalorder %s19, 1
      %p146 = por %p144, %p145
      %p147 = scmp.ne.s32.totalorder %s139, %s142
      %p148 = scmp.eq.s32.totalorder %s19, 0
      %p149 = por %p147, %p148
      %p150 = scmp.ne.s32.totalorder %s139, %s142
      %p151 = scmp.eq.s32.totalorder %s24, 1
      %p152 = por %p150, %p151
      %p153 = scmp.ne.s32.totalorder %s142, %s143
      %p154 = scmp.eq.s32.totalorder %s24, 0
      %p155 = por %p153, %p154
      %p156 = scmp.ne.s32.totalorder %s142, %s143
      %p157 = scmp.eq.s32.totalorder %s25, 1
      %p158 = por %p156, %p157
      %p160 = scmp.ne.s32.totalorder %s143, %s159
      %p161 = scmp.eq.s32.totalorder %s25, 0
      %p162 = por %p160, %p161
      %p163 = scmp.le.s32.totalorder 1, %s19
      %p164 = scmp.lt.s32.totalorder %s19, 3
      %p165 = pnand %p163, %p164
      %p166 = pneg %p165
      // Predicated region
      $region9: #{tpu_custom_call.1} parent=5 // pred_check
        _
      $region10: #{tpu_custom_call.1} parent=5 // pred_check_branch
        %168 = sbr.rel (%p165) target = $region12
      $region11: #{tpu_custom_call.1} parent=5 // pred_region
        %s169 = ssub.s32 %s19, 1
        // Predicated region
        $region13: #{tpu_custom_call.1} parent=11 // pred_check
          %p170 = pneg %p66
        $region14: #{tpu_custom_call.1} parent=11 // pred_check_branch
          %172 = sbr.rel (%p170) target = $region16
        $region15: #{tpu_custom_call.1} parent=11 // pred_region
          %174 = vsyncadd [#allocation6], 0
          %s175 = sshll.u32 %s1, 4
          %s176 = int_to_ptr.hbm [resolvable:$true] %s175
          %s177 = sshll.u32 [#allocation5], 4
          %s178 = int_to_ptr.vmem [resolvable:$true] %s177
          %183 = dma.hbm_to_vmem [thread:$0]  %s176, 2048, %s178, [#allocation6], 128, 128, 8
        $region16: #{tpu_custom_call.1} parent=11 // pred_fallthru
          _
        // Predicated region
        $region17: #{tpu_custom_call.1} parent=11 // pred_check
          %p184 = pneg %p87
        $region18: #{tpu_custom_call.1} parent=11 // pred_check_branch
          %186 = sbr.rel (%p184) target = $region20
        $region19: #{tpu_custom_call.1} parent=11 // pred_region
          %188 = vsyncadd [#allocation6], 0
          %s190 = sshll.u32 %s2, 4
          %s191 = int_to_ptr.hbm [resolvable:$true] %s190
          %s192 = sshll.u32 [#allocation7], 4
          %s193 = int_to_ptr.vmem [resolvable:$true] %s192
          %195 = dma.hbm_to_vmem [thread:$0]  %s191, 32, %s193, [#allocation6]
        $region20: #{tpu_custom_call.1} parent=11 // pred_fallthru
          _
        // Predicated region
        $region21: #{tpu_custom_call.1} parent=11 // pred_check
          %p196 = pneg %p108
        $region22: #{tpu_custom_call.1} parent=11 // pred_check_branch
          %198 = sbr.rel (%p196) target = $region24
        $region23: #{tpu_custom_call.1} parent=11 // pred_region
          %200 = vsyncadd [#allocation9], 0
          %s201 = sshll.u32 %s3, 4
          %s202 = int_to_ptr.hbm [resolvable:$true] %s201
          %s203 = sshll.u32 [#allocation8], 4
          %s204 = int_to_ptr.vmem [resolvable:$true] %s203
          %209 = dma.hbm_to_vmem [thread:$0]  %s202, 2048, %s204, [#allocation9], 64, 64, 4
        $region24: #{tpu_custom_call.1} parent=11 // pred_fallthru
          _
        // Predicated region
        $region25: #{tpu_custom_call.1} parent=11 // pred_check
          %p210 = pneg %p129
        $region26: #{tpu_custom_call.1} parent=11 // pred_check_branch
          %212 = sbr.rel (%p210) target = $region28
        $region27: #{tpu_custom_call.1} parent=11 // pred_region
          _
        $region28: #{tpu_custom_call.1} parent=11 // pred_fallthru
          _
      $region12: #{tpu_custom_call.1} parent=5 // pred_fallthru
        _
      %p213 = scmp.lt.s32.totalorder %s19, 2
      // Predicated region
      $region29: #{tpu_custom_call.1} parent=5 // pred_check
        %p214 = pneg %p213
      $region30: #{tpu_custom_call.1} parent=5 // pred_check_branch
        %216 = sbr.rel (%p214) target = $region32
      $region31: #{tpu_custom_call.1} parent=5 // pred_region
        // Predicated region
        $region33: #{tpu_custom_call.1} parent=31 // pred_check
          %p217 = pneg %p39
        $region34: #{tpu_custom_call.1} parent=31 // pred_check_branch
          %219 = sbr.rel (%p217) target = $region36
        $region35: #{tpu_custom_call.1} parent=31 // pred_region
          %s220 = sand.u32 %s29, 1
          %s221 = scalar_lea.sflag [#allocation3], %s220
          %s222 = sand.u32 %s29, 1
          %s223 = smul.addr %s222, 32
          %s224 = scalar_lea.vmem [#allocation2], %s223
          %s225 = smul.u32 8, %s19
          %227 = vsyncadd %s221, 0
          %s228 = smul.addr %s225, 4
          %s229 = scalar_lea.hbm %s0, %s228
          %s230 = sshll.u32 %s229, 4
          %s231 = int_to_ptr.hbm [resolvable:$true] %s230
          %s232 = sshll.u32 %s224, 4
          %s233 = int_to_ptr.vmem [resolvable:$true] %s232
          %238 = dma.hbm_to_vmem [thread:$0]  %s231, 512, %s233, %s221, 64, 64, 4
        $region36: #{tpu_custom_call.1} parent=31 // pred_fallthru
          _
      $region32: #{tpu_custom_call.1} parent=5 // pred_fallthru
        _
      %p239 = scmp.le.s32.totalorder 1, %s19
      %p240 = scmp.lt.s32.totalorder %s19, 3
      %p241 = pnand %p239, %p240
      %p242 = pneg %p241
      // Predicated region
      $region37: #{tpu_custom_call.1} parent=5 // pred_check
        _
      $region38: #{tpu_custom_call.1} parent=5 // pred_check_branch
        %244 = sbr.rel (%p241) target = $region40
      $region39: #{tpu_custom_call.1} parent=5 // pred_region
        %s245 = ssub.s32 %s19, 1
        %s246 = sand.u32 %s32, 1
        %s247 = scalar_lea.sflag [#allocation3], %s246
        %s248 = sand.u32 %s32, 1
        %s249 = smul.addr %s248, 32
        %s250 = scalar_lea.vmem [#allocation2], %s249
        // Predicated region
        $region41: #{tpu_custom_call.1} parent=39 // pred_check
          %p251 = pneg %p45
        $region42: #{tpu_custom_call.1} parent=39 // pred_check_branch
          %253 = sbr.rel (%p251) target = $region44
        $region43: #{tpu_custom_call.1} parent=39 // pred_region
          %255 = dma.done %s247, 512
        $region44: #{tpu_custom_call.1} parent=39 // pred_fallthru
          _
        // Predicated region
        $region45: #{tpu_custom_call.1} parent=39 // pred_check
          %p256 = pneg %p66
        $region46: #{tpu_custom_call.1} parent=39 // pred_check_branch
          %258 = sbr.rel (%p256) target = $region48
        $region47: #{tpu_custom_call.1} parent=39 // pred_region
          %260 = dma.done [#allocation6], 2048
        $region48: #{tpu_custom_call.1} parent=39 // pred_fallthru
          _
        // Predicated region
        $region49: #{tpu_custom_call.1} parent=39 // pred_check
          %p261 = pneg %p87
        $region50: #{tpu_custom_call.1} parent=39 // pred_check_branch
          %263 = sbr.rel (%p261) target = $region52
        $region51: #{tpu_custom_call.1} parent=39 // pred_region
          %265 = dma.done [#allocation6], 32
        $region52: #{tpu_custom_call.1} parent=39 // pred_fallthru
          _
        // Predicated region
        $region53: #{tpu_custom_call.1} parent=39 // pred_check
          %p266 = pneg %p108
        $region54: #{tpu_custom_call.1} parent=39 // pred_check_branch
          %268 = sbr.rel (%p266) target = $region56
        $region55: #{tpu_custom_call.1} parent=39 // pred_region
          %270 = dma.done [#allocation9], 2048
        $region56: #{tpu_custom_call.1} parent=39 // pred_fallthru
          _
        %s271 = sand.u32 %s32, 1
        %s272 = scalar_lea.sflag [#allocation3], %s271
        %s273 = sand.u32 %s32, 1
        %s274 = smul.addr %s273, 32
        %s275 = scalar_lea.vmem [#allocation2], %s274
        %p276 = pneg %p45
        %p277 = pneg %p42
        %p278 = pneg %p66
        %p279 = pneg %p63
        %p280 = pneg %p87
        %p281 = pneg %p84
        %p282 = pneg %p108
        %p283 = pneg %p105
        %p284 = pneg %p129
        %p285 = pneg %p126
        %p286 = pneg %p155
        %p287 = pneg %p152
        %s288 = sand.u32 %s142, 1
        %s289 = scalar_lea.sflag [#allocation4], %s288
        %s290 = sand.u32 %s142, 1
        %s291 = smul.addr %s290, 64
        %s292 = scalar_lea.vmem [#allocation10], %s291
        %s293 = smul.u32 8, %s24
        %s294 = smul.u32 8, %s24
        %v295 = vld [vmem:[%s250] sm:$0xf]
        %v296 = vld [vmem:[%s250 + $0x4] sm:$0xf]
        %v297 = vld [vmem:[%s250 + $0x8] sm:$0xf]
        %v298 = vld [vmem:[%s250 + $0xc] sm:$0xf]
        %v299 = vld [vmem:[%s250 + $0x10] sm:$0xf]
        %v300 = vld [vmem:[%s250 + $0x14] sm:$0xf]
        %v301 = vld [vmem:[%s250 + $0x18] sm:$0xf]
        %v302 = vld [vmem:[%s250 + $0x1c] sm:$0xf]
        %v303 = vld [vmem:[#allocation5] sm:$0xff]
        %v304 = vld [vmem:[#allocation5 + $0x8] sm:$0xff]
        %v305 = vld [vmem:[#allocation5 + $0x10] sm:$0xff]
        %v306 = vld [vmem:[#allocation5 + $0x18] sm:$0xff]
        %v307 = vld [vmem:[#allocation5 + $0x20] sm:$0xff]
        %v308 = vld [vmem:[#allocation5 + $0x28] sm:$0xff]
        %v309 = vld [vmem:[#allocation5 + $0x30] sm:$0xff]
        %v310 = vld [vmem:[#allocation5 + $0x38] sm:$0xff]
        %v311 = vld [vmem:[#allocation5 + $0x40] sm:$0xff]
        %v312 = vld [vmem:[#allocation5 + $0x48] sm:$0xff]
        %v313 = vld [vmem:[#allocation5 + $0x50] sm:$0xff]
        %v314 = vld [vmem:[#allocation5 + $0x58] sm:$0xff]
        %v315 = vld [vmem:[#allocation5 + $0x60] sm:$0xff]
        %v316 = vld [vmem:[#allocation5 + $0x68] sm:$0xff]
        %v317 = vld [vmem:[#allocation5 + $0x70] sm:$0xff]
        %v318 = vld [vmem:[#allocation5 + $0x78] sm:$0xff]
        %v319 = vld [vmem:[#allocation7] sm:$0x3]
        %v321 = vperm.slane %v319, 0
        %v322 = vperm.slane %v319, 1
        %v333 = vunpack.c.l.b16 %v295
        %v334 = vunpack.c.l.b16 %v296
        %v335 = vunpack.c.l.b16 %v297
        %v336 = vunpack.c.l.b16 %v298
        %v337 = vunpack.c.l.b16 %v299
        %v338 = vunpack.c.l.b16 %v300
        %v339 = vunpack.c.l.b16 %v301
        %v340 = vunpack.c.l.b16 %v302
        %v341 = vpack.c.b16 %v334, %v333
        %v342 = vpack.c.b16 %v336, %v335
        %v343 = vpack.c.b16 %v338, %v337
        %v344 = vpack.c.b16 %v340, %v339
        %v365 = vunpack.c.l.b16 %v303
        %v366 = vunpack.c.h.b16 %v303
        %v367 = vunpack.c.l.b16 %v304
        %v368 = vunpack.c.h.b16 %v304
        %v369 = vunpack.c.l.b16 %v305
        %v370 = vunpack.c.h.b16 %v305
        %v371 = vunpack.c.l.b16 %v306
        %v372 = vunpack.c.h.b16 %v306
        %v373 = vunpack.c.l.b16 %v307
        %v374 = vunpack.c.h.b16 %v307
        %v375 = vunpack.c.l.b16 %v308
        %v376 = vunpack.c.h.b16 %v308
        %v377 = vunpack.c.l.b16 %v309
        %v378 = vunpack.c.h.b16 %v309
        %v379 = vunpack.c.l.b16 %v310
        %v380 = vunpack.c.h.b16 %v310
        %v381 = vunpack.c.l.b16 %v311
        %v382 = vunpack.c.h.b16 %v311
        %v383 = vunpack.c.l.b16 %v312
        %v384 = vunpack.c.h.b16 %v312
        %v385 = vunpack.c.l.b16 %v313
        %v386 = vunpack.c.h.b16 %v313
        %v387 = vunpack.c.l.b16 %v314
        %v388 = vunpack.c.h.b16 %v314
        %v389 = vunpack.c.l.b16 %v315
        %v390 = vunpack.c.h.b16 %v315
        %v391 = vunpack.c.l.b16 %v316
        %v392 = vunpack.c.h.b16 %v316
        %v393 = vunpack.c.l.b16 %v317
        %v394 = vunpack.c.h.b16 %v317
        %v395 = vunpack.c.l.b16 %v318
        %v396 = vunpack.c.h.b16 %v318
        %v397 = vpack.c.b16 %v367, %v365
        %v398 = vpack.c.b16 %v368, %v366
        %v399 = vpack.c.b16 %v371, %v369
        %v400 = vpack.c.b16 %v372, %v370
        %v401 = vpack.c.b16 %v375, %v373
        %v402 = vpack.c.b16 %v376, %v374
        %v403 = vpack.c.b16 %v379, %v377
        %v404 = vpack.c.b16 %v380, %v378
        %v405 = vpack.c.b16 %v383, %v381
        %v406 = vpack.c.b16 %v384, %v382
        %v407 = vpack.c.b16 %v387, %v385
        %v408 = vpack.c.b16 %v388, %v386
        %v409 = vpack.c.b16 %v391, %v389
        %v410 = vpack.c.b16 %v392, %v390
        %v411 = vpack.c.b16 %v395, %v393
        %v412 = vpack.c.b16 %v396, %v394
        %429 = vmatpush.bf16.msra.mxu0 %v411
        %430 = vmatpush.bf16.msra.mxu0 %v409
        %431 = vmatpush.bf16.msra.mxu0 %v407
        %432 = vmatpush.bf16.msra.mxu0 %v405
        %433 = vmatpush.bf16.msra.mxu0 %v403
        %434 = vmatpush.bf16.msra.mxu0 %v401
        %435 = vmatpush.bf16.msra.mxu0 %v399
        %436 = vmatpush.bf16.msra.mxu0 %v397
        %437 = vmatmul.bf16.gmra.mxu0 %v341
        %v438 = vpop.f32.mrf.mxu0
        %v439 = vadd.f32 %v321, %v438
        %v440 = vpop.f32.mrf.mxu0
        %v441 = vadd.f32 %v321, %v440
        %442 = vmatmul.bf16.gmra.mxu0 %v342
        %v443 = vpop.f32.mrf.mxu0
        %v444 = vadd.f32 %v321, %v443
        %v445 = vpop.f32.mrf.mxu0
        %v446 = vadd.f32 %v321, %v445
        %447 = vmatmul.bf16.gmra.mxu0 %v343
        %v448 = vpop.f32.mrf.mxu0
        %v449 = vadd.f32 %v321, %v448
        %v450 = vpop.f32.mrf.mxu0
        %v451 = vadd.f32 %v321, %v450
        %452 = vmatmul.bf16.gmra.mxu0 %v344
        %v453 = vpop.f32.mrf.mxu0
        %v454 = vadd.f32 %v321, %v453
        %v455 = vpop.f32.mrf.mxu0
        %v456 = vadd.f32 %v321, %v455
        %457 = vdwg.mxu0
        %458 = vmatpush.bf16.msra.mxu0 %v412
        %459 = vmatpush.bf16.msra.mxu0 %v410
        %460 = vmatpush.bf16.msra.mxu0 %v408
        %461 = vmatpush.bf16.msra.mxu0 %v406
        %462 = vmatpush.bf16.msra.mxu0 %v404
        %463 = vmatpush.bf16.msra.mxu0 %v402
        %464 = vmatpush.bf16.msra.mxu0 %v400
        %465 = vmatpush.bf16.msra.mxu0 %v398
        %466 = vmatmul.bf16.gmra.mxu0 %v341
        %v467 = vpop.f32.mrf.mxu0
        %v468 = vadd.f32 %v322, %v467
        %v469 = vpop.f32.mrf.mxu0
        %v470 = vadd.f32 %v322, %v469
        %471 = vmatmul.bf16.gmra.mxu0 %v342
        %v472 = vpop.f32.mrf.mxu0
        %v473 = vadd.f32 %v322, %v472
        %v474 = vpop.f32.mrf.mxu0
        %v475 = vadd.f32 %v322, %v474
        %476 = vmatmul.bf16.gmra.mxu0 %v343
        %v477 = vpop.f32.mrf.mxu0
        %v478 = vadd.f32 %v322, %v477
        %v479 = vpop.f32.mrf.mxu0
        %v480 = vadd.f32 %v322, %v479
        %481 = vmatmul.bf16.gmra.mxu0 %v344
        %v482 = vpop.f32.mrf.mxu0
        %v483 = vadd.f32 %v322, %v482
        %v484 = vpop.f32.mrf.mxu0
        %v485 = vadd.f32 %v322, %v484
        %486 = vdwg.mxu0
        %v487 = vmax.f32 %v439, 0.0
        %v488 = vmax.f32 %v468, 0.0
        %v489 = vmax.f32 %v441, 0.0
        %v490 = vmax.f32 %v470, 0.0
        %v491 = vmax.f32 %v444, 0.0
        %v492 = vmax.f32 %v473, 0.0
        %v493 = vmax.f32 %v446, 0.0
        %v494 = vmax.f32 %v475, 0.0
        %v495 = vmax.f32 %v449, 0.0
        %v496 = vmax.f32 %v478, 0.0
        %v497 = vmax.f32 %v451, 0.0
        %v498 = vmax.f32 %v480, 0.0
        %v499 = vmax.f32 %v454, 0.0
        %v500 = vmax.f32 %v483, 0.0
        %v501 = vmax.f32 %v456, 0.0
        %v502 = vmax.f32 %v485, 0.0
        %v503 = vpack.c.bf16 %v489, %v487
        %v504 = vpack.c.bf16 %v490, %v488
        %v505 = vpack.c.bf16 %v493, %v491
        %v506 = vpack.c.bf16 %v494, %v492
        %v507 = vpack.c.bf16 %v497, %v495
        %v508 = vpack.c.bf16 %v498, %v496
        %v509 = vpack.c.bf16 %v501, %v499
        %v510 = vpack.c.bf16 %v502, %v500
        %v511 = vld [vmem:[#allocation8] sm:$0xf]
        %v512 = vld [vmem:[#allocation8 + $0x4] sm:$0xf]
        %v513 = vld [vmem:[#allocation8 + $0x8] sm:$0xf]
        %v514 = vld [vmem:[#allocation8 + $0xc] sm:$0xf]
        %v515 = vld [vmem:[#allocation8 + $0x10] sm:$0xf]
        %v516 = vld [vmem:[#allocation8 + $0x14] sm:$0xf]
        %v517 = vld [vmem:[#allocation8 + $0x18] sm:$0xf]
        %v518 = vld [vmem:[#allocation8 + $0x1c] sm:$0xf]
        %v519 = vld [vmem:[#allocation8 + $0x20] sm:$0xf]
        %v520 = vld [vmem:[#allocation8 + $0x24] sm:$0xf]
        %v521 = vld [vmem:[#allocation8 + $0x28] sm:$0xf]
        %v522 = vld [vmem:[#allocation8 + $0x2c] sm:$0xf]
        %v523 = vld [vmem:[#allocation8 + $0x30] sm:$0xf]
        %v524 = vld [vmem:[#allocation8 + $0x34] sm:$0xf]
        %v525 = vld [vmem:[#allocation8 + $0x38] sm:$0xf]
        %v526 = vld [vmem:[#allocation8 + $0x3c] sm:$0xf]
        %v527 = vld [vmem:[#allocation8 + $0x40] sm:$0xf]
        %v528 = vld [vmem:[#allocation8 + $0x44] sm:$0xf]
        %v529 = vld [vmem:[#allocation8 + $0x48] sm:$0xf]
        %v530 = vld [vmem:[#allocation8 + $0x4c] sm:$0xf]
        %v531 = vld [vmem:[#allocation8 + $0x50] sm:$0xf]
        %v532 = vld [vmem:[#allocation8 + $0x54] sm:$0xf]
        %v533 = vld [vmem:[#allocation8 + $0x58] sm:$0xf]
        %v534 = vld [vmem:[#allocation8 + $0x5c] sm:$0xf]
        %v535 = vld [vmem:[#allocation8 + $0x60] sm:$0xf]
        %v536 = vld [vmem:[#allocation8 + $0x64] sm:$0xf]
        %v537 = vld [vmem:[#allocation8 + $0x68] sm:$0xf]
        %v538 = vld [vmem:[#allocation8 + $0x6c] sm:$0xf]
        %v539 = vld [vmem:[#allocation8 + $0x70] sm:$0xf]
        %v540 = vld [vmem:[#allocation8 + $0x74] sm:$0xf]
        %v541 = vld [vmem:[#allocation8 + $0x78] sm:$0xf]
        %v542 = vld [vmem:[#allocation8 + $0x7c] sm:$0xf]
        %v543 = vld [vmem:[%s4] sm:$0x1]
        %v545 = vperm.slane %v543, 0
        %v579 = vunpack.c.l.b16 %v511
        %v580 = vunpack.c.l.b16 %v512
        %v581 = vunpack.c.l.b16 %v513
        %v582 = vunpack.c.l.b16 %v514
        %v583 = vunpack.c.l.b16 %v515
        %v584 = vunpack.c.l.b16 %v516
        %v585 = vunpack.c.l.b16 %v517
        %v586 = vunpack.c.l.b16 %v518
        %v587 = vunpack.c.l.b16 %v519
        %v588 = vunpack.c.l.b16 %v520
        %v589 = vunpack.c.l.b16 %v521
        %v590 = vunpack.c.l.b16 %v522
        %v591 = vunpack.c.l.b16 %v523
        %v592 = vunpack.c.l.b16 %v524
        %v593 = vunpack.c.l.b16 %v525
        %v594 = vunpack.c.l.b16 %v526
        %v595 = vunpack.c.l.b16 %v527
        %v596 = vunpack.c.l.b16 %v528
        %v597 = vunpack.c.l.b16 %v529
        %v598 = vunpack.c.l.b16 %v530
        %v599 = vunpack.c.l.b16 %v531
        %v600 = vunpack.c.l.b16 %v532
        %v601 = vunpack.c.l.b16 %v533
        %v602 = vunpack.c.l.b16 %v534
        %v603 = vunpack.c.l.b16 %v535
        %v604 = vunpack.c.l.b16 %v536
        %v605 = vunpack.c.l.b16 %v537
        %v606 = vunpack.c.l.b16 %v538
        %v607 = vunpack.c.l.b16 %v539
        %v608 = vunpack.c.l.b16 %v540
        %v609 = vunpack.c.l.b16 %v541
        %v610 = vunpack.c.l.b16 %v542
        %v611 = vpack.c.b16 %v580, %v579
        %v612 = vpack.c.b16 %v582, %v581
        %v613 = vpack.c.b16 %v584, %v583
        %v614 = vpack.c.b16 %v586, %v585
        %v615 = vpack.c.b16 %v588, %v587
        %v616 = vpack.c.b16 %v590, %v589
        %v617 = vpack.c.b16 %v592, %v591
        %v618 = vpack.c.b16 %v594, %v593
        %v619 = vpack.c.b16 %v596, %v595
        %v620 = vpack.c.b16 %v598, %v597
        %v621 = vpack.c.b16 %v600, %v599
        %v622 = vpack.c.b16 %v602, %v601
        %v623 = vpack.c.b16 %v604, %v603
        %v624 = vpack.c.b16 %v606, %v605
        %v625 = vpack.c.b16 %v608, %v607
        %v626 = vpack.c.b16 %v610, %v609
        %643 = vmatpush.bf16.msra.mxu0 %v618
        %644 = vmatpush.bf16.msra.mxu0 %v617
        %645 = vmatpush.bf16.msra.mxu0 %v616
        %646 = vmatpush.bf16.msra.mxu0 %v615
        %647 = vmatpush.bf16.msra.mxu0 %v614
        %648 = vmatpush.bf16.msra.mxu0 %v613
        %649 = vmatpush.bf16.msra.mxu0 %v612
        %650 = vmatpush.bf16.msra.mxu0 %v611
        %651 = vmatmul.bf16.gmra.mxu0 %v503
        %v652 = vpop.f32.mrf.mxu0
        %v653 = vadd.f32 %v545, %v652
        %v654 = vpop.f32.mrf.mxu0
        %v655 = vadd.f32 %v545, %v654
        %656 = vmatmul.bf16.gmra.mxu0 %v505
        %v657 = vpop.f32.mrf.mxu0
        %v658 = vadd.f32 %v545, %v657
        %v659 = vpop.f32.mrf.mxu0
        %v660 = vadd.f32 %v545, %v659
        %661 = vmatmul.bf16.gmra.mxu0 %v507
        %v662 = vpop.f32.mrf.mxu0
        %v663 = vadd.f32 %v545, %v662
        %v664 = vpop.f32.mrf.mxu0
        %v665 = vadd.f32 %v545, %v664
        %666 = vmatmul.bf16.gmra.mxu0 %v509
        %v667 = vpop.f32.mrf.mxu0
        %v668 = vadd.f32 %v545, %v667
        %v669 = vpop.f32.mrf.mxu0
        %v670 = vadd.f32 %v545, %v669
        %671 = vdwg.mxu0
        %672 = vmatpush.bf16.msra.mxu0 %v626
        %673 = vmatpush.bf16.msra.mxu0 %v625
        %674 = vmatpush.bf16.msra.mxu0 %v624
        %675 = vmatpush.bf16.msra.mxu0 %v623
        %676 = vmatpush.bf16.msra.mxu0 %v622
        %677 = vmatpush.bf16.msra.mxu0 %v621
        %678 = vmatpush.bf16.msra.mxu0 %v620
        %679 = vmatpush.bf16.msra.mxu0 %v619
        %680 = vmatmul.bf16.gmra.mxu0 %v504
        %v681 = vpop.f32.mrf.mxu0
        %v682 = vadd.f32 %v653, %v681
        %v683 = vpop.f32.mrf.mxu0
        %v684 = vadd.f32 %v655, %v683
        %685 = vmatmul.bf16.gmra.mxu0 %v506
        %v686 = vpop.f32.mrf.mxu0
        %v687 = vadd.f32 %v658, %v686
        %v688 = vpop.f32.mrf.mxu0
        %v689 = vadd.f32 %v660, %v688
        %690 = vmatmul.bf16.gmra.mxu0 %v508
        %v691 = vpop.f32.mrf.mxu0
        %v692 = vadd.f32 %v663, %v691
        %v693 = vpop.f32.mrf.mxu0
        %v694 = vadd.f32 %v665, %v693
        %695 = vmatmul.bf16.gmra.mxu0 %v510
        %v696 = vpop.f32.mrf.mxu0
        %v697 = vadd.f32 %v668, %v696
        %v698 = vpop.f32.mrf.mxu0
        %v699 = vadd.f32 %v670, %v698
        %700 = vdwg.mxu0
        %701 = vst [vmem:[%s292] sm:$0xff] %v682
        %702 = vst [vmem:[%s292 + $0x8] sm:$0xff] %v684
        %703 = vst [vmem:[%s292 + $0x10] sm:$0xff] %v687
        %704 = vst [vmem:[%s292 + $0x18] sm:$0xff] %v689
        %705 = vst [vmem:[%s292 + $0x20] sm:$0xff] %v692
        %706 = vst [vmem:[%s292 + $0x28] sm:$0xff] %v694
        %707 = vst [vmem:[%s292 + $0x30] sm:$0xff] %v697
        %708 = vst [vmem:[%s292 + $0x38] sm:$0xff] %v699
        %s709 = sand.u32 %s142, 1
        %s710 = scalar_lea.sflag [#allocation4], %s709
        %s711 = sand.u32 %s142, 1
        %s712 = smul.addr %s711, 64
        %s713 = scalar_lea.vmem [#allocation10], %s712
        // Predicated region
        $region57: #{tpu_custom_call.1} parent=39 // pred_check
          %p714 = pneg %p152
        $region58: #{tpu_custom_call.1} parent=39 // pred_check_branch
          %716 = sbr.rel (%p714) target = $region60
        $region59: #{tpu_custom_call.1} parent=39 // pred_region
          %s717 = smul.u32 8, %s24
          %719 = vsyncadd %s710, 0
          %s720 = smul.addr %s717, 8
          %s721 = scalar_lea.hbm %s5, %s720
          %s722 = sshll.u32 %s713, 4
          %s723 = int_to_ptr.vmem [resolvable:$true] %s722
          %s724 = sshll.u32 %s721, 4
          %s725 = int_to_ptr.hbm [resolvable:$true] %s724
          %730 = dma.vmem_to_hbm [thread:$0]  %s723, 1024, %s725, %s710, 128, 128, 8
        $region60: #{tpu_custom_call.1} parent=39 // pred_fallthru
          _
      $region40: #{tpu_custom_call.1} parent=5 // pred_fallthru
        _
      %p731 = scmp.le.s32.totalorder 2, %s19
      // Predicated region
      $region61: #{tpu_custom_call.1} parent=5 // pred_check
        %p732 = pneg %p731
      $region62: #{tpu_custom_call.1} parent=5 // pred_check_branch
        %734 = sbr.rel (%p732) target = $region64
      $region63: #{tpu_custom_call.1} parent=5 // pred_region
        %s735 = ssub.s32 %s19, 2
        // Predicated region
        $region65: #{tpu_custom_call.1} parent=63 // pred_check
          %p736 = pneg %p158
        $region66: #{tpu_custom_call.1} parent=63 // pred_check_branch
          %738 = sbr.rel (%p736) target = $region68
        $region67: #{tpu_custom_call.1} parent=63 // pred_region
          %s739 = sand.u32 %s143, 1
          %s740 = scalar_lea.sflag [#allocation4], %s739
          %s741 = sand.u32 %s143, 1
          %s742 = smul.addr %s741, 64
          %s743 = scalar_lea.vmem [#allocation10], %s742
          %745 = dma.done %s740, 1024
        $region68: #{tpu_custom_call.1} parent=63 // pred_fallthru
          _
      $region64: #{tpu_custom_call.1} parent=5 // pred_fallthru
        _
    $region6: #{tpu_custom_call.1} parent=1 // loop_footer
      %s23 = sadd.s32 1, %s19
    $region7: #{tpu_custom_call.1} parent=1 // loop_footer_branch
      %18 = sbr.rel target = $region3
    $region8: #{tpu_custom_call.1} parent=1 // loop_exit
      _
    %746 = vsyncpa [#allocation3], 1
    %s747 = scalar_lea.sflag [#allocation3], 1
    %748 = vsyncpa %s747, 1
    %749 = vsyncpa [#allocation6], 1
    %750 = vsyncpa [#allocation9], 1
    %751 = vsyncpa [#allocation4], 1
    %s752 = scalar_lea.sflag [#allocation4], 1
    %753 = vsyncpa %s752, 1

</llo_original>
